<compile_context>
chip_gen: v7x
topology: tpu7x:2x2x1
jax: 0.10.0
libtpu: 0.0.40
codegen_flags: <defaults>
</compile_context>

<pallas_src>
import jax
import jax.numpy as jnp
from jax.experimental import pallas as pl
from jax.experimental.pallas import tpu as pltpu


def _model_basic_kernel(xs_ref, wt_ref, wbd_ref, bias_ref, o_ref):
    # xs_ref  : (S, TB*Din)        time-major input slab (batch folded into lanes)
    # wt_ref  : (P, S)             time-projection weight (grid-invariant)
    # wbd_ref : (TB*Din, TB*Dout)  block-diagonal feature weight (grid-invariant)
    # bias_ref: (P, TB*Dout)       folded bias, tiled over the batch block (f32)
    # o_ref   : (P, TB*Dout)       lane-dense output slab

    # GEMM 1 — time projection, batch folded into MXU N (one matmul per block,
    # no broadcast of the weight, no per-batch MXU passes).
    t = jnp.dot(wt_ref[...], xs_ref[...], preferred_element_type=jnp.float32)

    # Keep GEMM 2 on the fast input-dtype MXU path (bf16 at scale); f32 accumulate.
    t = t.astype(xs_ref.dtype)

    # GEMM 2 — feature projection via the block-diagonal weight: batch stays in N
    # and the result is already the lane-dense (P, TB*Dout) slab (no in-kernel
    # reshape/transpose, no lane-sparse trailing-Dout stores).
    y = jnp.dot(t, wbd_ref[...], preferred_element_type=jnp.float32)

    # Single folded-bias add, one dense store of the whole slab.
    o_ref[...] = (y + bias_ref[...]).astype(o_ref.dtype)


def _select_batch_block(B, S, Din, Dout, P, itemsize, batch_block):
    """Pick the batch block (TB) per the review's per-generation guidance."""
    if batch_block is not None:
        tb = int(batch_block)
        assert 1 <= tb <= B and B % tb == 0, "batch_block must evenly divide B"
        return tb

    def legal(tb):
        # Blocked (non-full) trailing dims must be 128-multiples; full dims are ok.
        if B % tb:
            return False
        if tb == B:
            return True
        return (tb * Din) % 128 == 0 and (tb * Dout) % 128 == 0

    def fits(tb):
        # Conservative budget that also fits v7x's smaller scoped VMEM.
        budget = 24 << 20
        fp = (2 * S * tb * Din * itemsize          # x slab (double-buffered)
              + 2 * P * tb * Dout * itemsize       # output slab (double-buffered)
              + (tb * Din) * (tb * Dout) * itemsize  # block-diag feature weight
              + P * S * itemsize
              + P * tb * Dout * 4)                 # folded bias (f32)
        return fp <= budget

    try:
        kind = jax.devices()[0].device_kind.lower()
    except Exception:
        kind = ""
    prefer_two = "v7" in kind  # v7x: 2 TensorCores -> want a >=2-way parallel grid

    candidates = []
    if prefer_two and B % 2 == 0:
        candidates.append(B // 2)
    candidates.append(B)          # single-TC chips: one big block, no per-step overhead
    t = B
    while t > 1:                  # VMEM-driven fallbacks
        t //= 2
        candidates.append(t)
    for tb in candidates:
        if tb >= 1 and B % tb == 0 and legal(tb) and fits(tb):
            return tb
    return B


def model_basic_forward(x, w_time, b_time, w_feat, b_feat, *, batch_block=None):
    """x: (B, S, Din) -> (B, P, Dout)."""
    B, S, Din = x.shape
    P = w_time.shape[0]
    Dout = w_feat.shape[0]
    dtype = x.dtype
    itemsize = dtype.itemsize

    tb = _select_batch_block(B, S, Din, Dout, P, itemsize, batch_block)
    nblk = B // tb

    # ---- Grid-invariant prep, done ONCE in the wrapper (layout plumbing + algebra) ----
    # 1) Time-major input slab: x_slab[s, b*Din + d] = x[b, s, d].  Moves the only
    #    relayout of x to the call boundary so the kernel never reshapes a ref/value.
    x_slab = jnp.transpose(x, (1, 0, 2)).reshape(S, B * Din)

    # 2) Pre-transposed feature weight, expanded block-diagonally so the feature GEMM
    #    keeps the batch folded into N and emits the lane-dense slab directly.
    w_time_c = w_time.astype(dtype)                              # (P, S)
    w_feat_t = jnp.transpose(w_feat).astype(dtype)               # (Din, Dout)
    w_feat_bd = jnp.kron(jnp.eye(tb, dtype=dtype), w_feat_t)     # (tb*Din, tb*Dout)

    # 3) Fold both biases: (Wt x + bt 1^T) Wf^T + 1 bf^T = Wt x Wf^T + [bt (1^T Wf^T) + bf]
    b_comb = (b_time.astype(jnp.float32)[:, None]
              * jnp.sum(w_feat.astype(jnp.float32), axis=1)[None, :]
              + b_feat.astype(jnp.float32)[None, :])             # (P, Dout)
    b_tile = jnp.tile(b_comb, (1, tb))                           # (P, tb*Dout)

    flops = 2 * P * S * (B * Din) + 2 * P * (tb * Din) * (tb * Dout) * nblk
    bytes_accessed = (S * B * Din * itemsize            # x slab
                      + P * S * itemsize                # w_time
                      + (tb * Din) * (tb * Dout) * itemsize  # block-diag w_feat
                      + P * tb * Dout * 4               # folded bias (f32)
                      + P * B * Dout * itemsize)        # output slab

    y_slab = pl.pallas_call(
        _model_basic_kernel,
        out_shape=jax.ShapeDtypeStruct((P, B * Dout), dtype),
        grid_spec=pltpu.PrefetchScalarGridSpec(
            num_scalar_prefetch=0,
            grid=(nblk,),
            in_specs=[
                pl.BlockSpec((S, tb * Din), lambda i: (0, i)),
                pl.BlockSpec((P, S), lambda i: (0, 0)),
                pl.BlockSpec((tb * Din, tb * Dout), lambda i: (0, 0)),
                pl.BlockSpec((P, tb * Dout), lambda i: (0, 0)),
            ],
            out_specs=pl.BlockSpec((P, tb * Dout), lambda i: (0, i)),
        ),
        compiler_params=pltpu.CompilerParams(
            dimension_semantics=("parallel",),
        ),
        cost_estimate=pl.CostEstimate(
            flops=int(flops),
            transcendentals=0,
            bytes_accessed=int(bytes_accessed),
        ),
    )(x_slab, w_time_c, w_feat_bd, b_tile)

    # Lane-dense slab -> (B, P, Dout): wrapper-side plumbing, not kernel work.
    return jnp.transpose(y_slab.reshape(P, B, Dout), (1, 0, 2))


def reference_forward(x, w_time, b_time, w_feat, b_feat):
    # Pure-JAX reference mirroring the PyTorch semantics:
    #   t = Linear_time(x.transpose(1,2)).transpose(1,2); y = Linear_feat(t)
    t = jnp.einsum("bsd,ps->bpd", x, w_time) + b_time[None, :, None]
    y = jnp.einsum("bpd,od->bpo", t, w_feat) + b_feat[None, None, :]
    return y


if __name__ == "__main__":
    # Small shapes consistent with the module's __init__ parameters.
    B, seq_len, pred_len, in_dim, out_dim = 2, 8, 4, 4, 8

    key = jax.random.PRNGKey(0)
    kx, kwt, kbt, kwf, kbf = jax.random.split(key, 5)

    x = jax.random.normal(kx, (B, seq_len, in_dim), dtype=jnp.float32)

    # Deterministic synthetic parameters (nn.Linear weight conventions).
    w_time = jax.random.normal(kwt, (pred_len, seq_len), dtype=jnp.float32) * 0.1
    b_time = jax.random.normal(kbt, (pred_len,), dtype=jnp.float32) * 0.1
    w_feat = jax.random.normal(kwf, (out_dim, in_dim), dtype=jnp.float32) * 0.1
    b_feat = jax.random.normal(kbf, (out_dim,), dtype=jnp.float32) * 0.1

    y = model_basic_forward(x, w_time, b_time, w_feat, b_feat)
    y = jax.block_until_ready(y)

    y_ref = reference_forward(x, w_time, b_time, w_feat, b_feat)
    assert y.shape == (B, pred_len, out_dim)
    assert jnp.allclose(y, y_ref, atol=1e-5, rtol=1e-5)

    # TODO(synk): ModelBasic.forward is abstract; this kernel implements the
    # canonical time+feature linear projection implied by its constructor args.

    print("KERNEL_OK")
</pallas_src>

<mosaic_0001>
module attributes {stable_mosaic.version = 11 : i64} {
  func.func @_model_basic_kernel(%arg0: i32, %arg1: memref<8x8xf32, #tpu.memory_space<vmem>>, %arg2: memref<4x8xf32, #tpu.memory_space<vmem>>, %arg3: memref<8x16xf32, #tpu.memory_space<vmem>>, %arg4: memref<4x16xf32, #tpu.memory_space<vmem>>, %arg5: memref<4x16xf32, #tpu.memory_space<vmem>>) attributes {dimension_semantics = [#tpu.dimension_semantics<parallel>], iteration_bounds = array<i64: 1>, scalar_prefetch = 0 : i64, scratch_operands = 0 : i64, tpu.core_type = #tpu.core_type<tc>, window_params = [{transform_indices = @transform_0, window_bounds = array<i64: 8, 8>}, {pipeline_mode = #tpu.pipeline_mode<synchronous>, transform_indices = @transform_1, window_bounds = array<i64: 4, 8>}, {pipeline_mode = #tpu.pipeline_mode<synchronous>, transform_indices = @transform_2, window_bounds = array<i64: 8, 16>}, {pipeline_mode = #tpu.pipeline_mode<synchronous>, transform_indices = @transform_3, window_bounds = array<i64: 4, 16>}, {transform_indices = @transform_4, window_bounds = array<i64: 4, 16>}]} {
    %c0 = arith.constant 0 : index
    %c0_0 = arith.constant 0 : index
    %0 = vector.load %arg2[%c0, %c0_0] : memref<4x8xf32, #tpu.memory_space<vmem>>, vector<4x8xf32>
    %c0_1 = arith.constant 0 : index
    %c0_2 = arith.constant 0 : index
    %1 = vector.load %arg1[%c0_1, %c0_2] : memref<8x8xf32, #tpu.memory_space<vmem>>, vector<8x8xf32>
    %cst = arith.constant dense<0.000000e+00> : vector<4x8xf32>
    %2 = tpu.matmul %0, %1, %cst {dimension_numbers = #tpu.dot_dimension_numbers<[1], [0], [0], [1], [0, 0, 1, 1], [], []>} : vector<4x8xf32>, vector<8x8xf32>, vector<4x8xf32> -> vector<4x8xf32>
    %c0_3 = arith.constant 0 : index
    %c0_4 = arith.constant 0 : index
    %3 = vector.load %arg3[%c0_3, %c0_4] : memref<8x16xf32, #tpu.memory_space<vmem>>, vector<8x16xf32>
    %cst_5 = arith.constant dense<0.000000e+00> : vector<4x16xf32>
    %4 = tpu.matmul %2, %3, %cst_5 {dimension_numbers = #tpu.dot_dimension_numbers<[1], [0], [0], [1], [0, 0, 1, 1], [], []>} : vector<4x8xf32>, vector<8x16xf32>, vector<4x16xf32> -> vector<4x16xf32>
    %c0_6 = arith.constant 0 : index
    %c0_7 = arith.constant 0 : index
    %5 = vector.load %arg4[%c0_6, %c0_7] : memref<4x16xf32, #tpu.memory_space<vmem>>, vector<4x16xf32>
    %6 = arith.addf %4, %5 : vector<4x16xf32>
    %c0_8 = arith.constant 0 : index
    %c0_9 = arith.constant 0 : index
    %7 = vector.load %arg5[%c0_8, %c0_9] : memref<4x16xf32, #tpu.memory_space<vmem>>, vector<4x16xf32>
    tpu.vector_store %arg5[%c0_8, %c0_9], %6 {strides = array<i32>} : memref<4x16xf32, #tpu.memory_space<vmem>>, vector<4x16xf32>,
    return
  }
  func.func @transform_0(%arg0: i32) -> (i32, i32) {
    %c0_i32 = arith.constant 0 : i32
    %c0_i32_0 = arith.constant 0 : i32
    return %c0_i32, %arg0 : i32, i32
  }
  func.func @transform_1(%arg0: i32) -> (i32, i32) {
    %c0_i32 = arith.constant 0 : i32
    %c0_i32_0 = arith.constant 0 : i32
    %c0_i32_1 = arith.constant 0 : i32
    return %c0_i32, %c0_i32_0 : i32, i32
  }
  func.func @transform_2(%arg0: i32) -> (i32, i32) {
    %c0_i32 = arith.constant 0 : i32
    %c0_i32_0 = arith.constant 0 : i32
    %c0_i32_1 = arith.constant 0 : i32
    return %c0_i32, %c0_i32_0 : i32, i32
  }
  func.func @transform_3(%arg0: i32) -> (i32, i32) {
    %c0_i32 = arith.constant 0 : i32
    %c0_i32_0 = arith.constant 0 : i32
    %c0_i32_1 = arith.constant 0 : i32
    return %c0_i32, %c0_i32_0 : i32, i32
  }
  func.func @transform_4(%arg0: i32) -> (i32, i32) {
    %c0_i32 = arith.constant 0 : i32
    %c0_i32_0 = arith.constant 0 : i32
    return %c0_i32, %arg0 : i32, i32
  }
}

</mosaic_0001>

<llo_original>
// kernel: tpu_custom_call.1
$region0: #{tpu_custom_call.1}
  #allocation0 [shape = 'u32[]', space=smem, size = 0x4, offset = 0x4, fixed_abs, tag = 'smem constant byte address 0x4 - core index']
  #allocation1 [shape = 'u32[144,128]{1,0:T(1,128)}', space=vmem, size = 0x12000, scoped, tag = 'internal scratch']
  %s0 = inlined_call_operand.hbm [shape: f32[8,8], index: 0, kind: input, shape index: {}]
  %s1 = inlined_call_operand.hbm [shape: f32[4,8], index: 1, kind: input, shape index: {}]
  %s2 = inlined_call_operand.hbm [shape: f32[8,16], index: 2, kind: input, shape index: {}]
  %s3 = inlined_call_operand.vmem [shape: f32[4,16], index: 3, kind: input, shape index: {}]
  %s4 = inlined_call_operand.hbm [shape: f32[4,16], index: 4, kind: output, shape index: {}]
  %s5 = sld [smem:[#allocation0]]
  $region38: #{tpu_custom_call.1} parent=0
    _
  %s7 = ssub.s32 1, %s5
  %s8 = scalar_select 0, %s7, %s5
  $region1: #{tpu_custom_call.1} parent=0
    #allocation2 [shape = 'u8[4096]{0}', space=vmem, size = 0x1000, scoped, tag = 'input window, operand 0, single buffered']
    #allocation3 [shape = 's32[1]{0}', space=sflag, size = 0x4, scoped, tag = 'scoped memory for tpu_custom_call.1']
    #allocation4 [shape = 's32[1]{0}', space=sflag, size = 0x4, scoped, tag = 'scoped memory for tpu_custom_call.1']
    #allocation5 [shape = 'u8[2048]{0}', space=vmem, size = 0x800, scoped, tag = 'input window, operand 1, single buffered']
    #allocation6 [shape = 's32[1]{0}', space=sflag, size = 0x4, scoped, tag = 'scoped memory for tpu_custom_call.1']
    #allocation7 [shape = 'u8[4096]{0}', space=vmem, size = 0x1000, scoped, tag = 'input window, operand 2, single buffered']
    #allocation8 [shape = 'u8[2048]{0}', space=vmem, size = 0x800, scoped, tag = 'output window, operand 0, single buffered']
    %9 = vsyncpa [#allocation3], 0
    %10 = vsyncpa [#allocation6], 0
    %11 = vsyncpa [#allocation4], 0
    // Predicated region
    $region2: #{tpu_custom_call.1} parent=1 // pred_check
      _
    $region3: #{tpu_custom_call.1} parent=1 // pred_check_branch
      %13 = sbr.rel (0) target = $region5
    $region4: #{tpu_custom_call.1} parent=1 // pred_region
      %s15 = ssub.s32 128, 128
      %16 = vsyncadd [#allocation3], %s15
      %s18 = sshll.u32 [#allocation2], 4
      %s19 = int_to_ptr.vmem [resolvable:$true] %s18
      %21 = dma.hbm_to_vmem [thread:$0]  %s0, 128, %s19, [#allocation3]
    $region5: #{tpu_custom_call.1} parent=1 // pred_fallthru
      _
    // Predicated region
    $region6: #{tpu_custom_call.1} parent=1 // pred_check
      _
    $region7: #{tpu_custom_call.1} parent=1 // pred_check_branch
      %23 = sbr.rel (0) target = $region9
    $region8: #{tpu_custom_call.1} parent=1 // pred_region
      %s25 = ssub.s32 64, 64
      %26 = vsyncadd [#allocation6], %s25
      %s28 = sshll.u32 [#allocation5], 4
      %s29 = int_to_ptr.vmem [resolvable:$true] %s28
      %31 = dma.hbm_to_vmem [thread:$0]  %s1, 64, %s29, [#allocation6]
    $region9: #{tpu_custom_call.1} parent=1 // pred_fallthru
      _
    // Predicated region
    $region10: #{tpu_custom_call.1} parent=1 // pred_check
      _
    $region11: #{tpu_custom_call.1} parent=1 // pred_check_branch
      %33 = sbr.rel (0) target = $region13
    $region12: #{tpu_custom_call.1} parent=1 // pred_region
      %s35 = ssub.s32 128, 128
      %36 = vsyncadd [#allocation6], %s35
      %s38 = sshll.u32 [#allocation7], 4
      %s39 = int_to_ptr.vmem [resolvable:$true] %s38
      %41 = dma.hbm_to_vmem [thread:$0]  %s2, 128, %s39, [#allocation6]
    $region13: #{tpu_custom_call.1} parent=1 // pred_fallthru
      _
    // Predicated region
    $region14: #{tpu_custom_call.1} parent=1 // pred_check
      _
    $region15: #{tpu_custom_call.1} parent=1 // pred_check_branch
      %43 = sbr.rel (0) target = $region17
    $region16: #{tpu_custom_call.1} parent=1 // pred_region
      _
    $region17: #{tpu_custom_call.1} parent=1 // pred_fallthru
      _
    // Predicated region
    $region18: #{tpu_custom_call.1} parent=1 // pred_check
      _
    $region19: #{tpu_custom_call.1} parent=1 // pred_check_branch
      %45 = sbr.rel (0) target = $region21
    $region20: #{tpu_custom_call.1} parent=1 // pred_region
      %46 = dma.done [#allocation3], 128
    $region21: #{tpu_custom_call.1} parent=1 // pred_fallthru
      _
    // Predicated region
    $region22: #{tpu_custom_call.1} parent=1 // pred_check
      _
    $region23: #{tpu_custom_call.1} parent=1 // pred_check_branch
      %48 = sbr.rel (0) target = $region25
    $region24: #{tpu_custom_call.1} parent=1 // pred_region
      %49 = dma.done [#allocation6], 64
    $region25: #{tpu_custom_call.1} parent=1 // pred_fallthru
      _
    // Predicated region
    $region26: #{tpu_custom_call.1} parent=1 // pred_check
      _
    $region27: #{tpu_custom_call.1} parent=1 // pred_check_branch
      %51 = sbr.rel (0) target = $region29
    $region28: #{tpu_custom_call.1} parent=1 // pred_region
      %52 = dma.done [#allocation6], 128
    $region29: #{tpu_custom_call.1} parent=1 // pred_fallthru
      _
    %v53 = vld [vmem:[#allocation5] sm:$0xf]
    %v54 = vld [vmem:[#allocation2] sm:$0xff]
    %vm55 = vcmask 64512
    %v57 = vsel %vm55, %v53, 0
    %59 = vmatprep.subr.mxu0 0.0
    %60 = vmatpush1.msra.mxu0 %v54
    %61 = vmatprep.subr.mxu0 0.0
    %62 = vmatpush1.msra.mxu0 0.0
    %63 = vmatprep.subr.mxu0 0.0
    %64 = vmatpush1.msra.mxu0 0.0
    %65 = vmatprep.subr.mxu0 0.0
    %66 = vmatpush1.msra.mxu0 0.0
    %67 = vmatprep.subr.mxu0 0.0
    %68 = vmatpush1.msra.mxu0 0.0
    %69 = vmatprep.subr.mxu0 0.0
    %70 = vmatpush1.msra.mxu0 0.0
    %71 = vmatprep.subr.mxu0 0.0
    %72 = vmatpush1.msra.mxu0 0.0
    %73 = vmatprep.subr.mxu0 0.0
    %74 = vmatpush1.msra.mxu0 0.0
    %75 = vmatprep.subr.mxu0 0.0
    %76 = vmatpush1.msra.mxu0 0.0
    %77 = vmatprep.subr.mxu0 0.0
    %78 = vmatpush1.msra.mxu0 0.0
    %79 = vmatprep.subr.mxu0 0.0
    %80 = vmatpush1.msra.mxu0 0.0
    %81 = vmatprep.subr.mxu0 0.0
    %82 = vmatpush1.msra.mxu0 0.0
    %83 = vmatprep.subr.mxu0 0.0
    %84 = vmatpush1.msra.mxu0 0.0
    %85 = vmatprep.subr.mxu0 0.0
    %86 = vmatpush1.msra.mxu0 0.0
    %87 = vmatprep.subr.mxu0 0.0
    %88 = vmatpush1.msra.mxu0 0.0
    %89 = vmatprep.subr.mxu0 0.0
    %90 = vmatpush1.msra.mxu0 0.0
    %91 = vmatprep.subr.mxu0 0.0
    %92 = vmatpush1.msra.mxu0 0.0
    %93 = vmatprep.subr.mxu0 0.0
    %94 = vmatpush1.msra.mxu0 0.0
    %95 = vmatprep.subr.mxu0 0.0
    %96 = vmatpush1.msra.mxu0 0.0
    %97 = vmatprep.subr.mxu0 0.0
    %98 = vmatpush1.msra.mxu0 0.0
    %99 = vmatprep.subr.mxu0 0.0
    %100 = vmatpush1.msra.mxu0 0.0
    %101 = vmatprep.subr.mxu0 0.0
    %102 = vmatpush1.msra.mxu0 0.0
    %103 = vmatprep.subr.mxu0 0.0
    %104 = vmatpush1.msra.mxu0 0.0
    %105 = vmatprep.subr.mxu0 0.0
    %106 = vmatpush1.msra.mxu0 0.0
    %107 = vmatprep.subr.mxu0 0.0
    %108 = vmatpush1.msra.mxu0 0.0
    %109 = vmatprep.subr.mxu0 0.0
    %110 = vmatpush1.msra.mxu0 0.0
    %111 = vmatprep.subr.mxu0 0.0
    %112 = vmatpush1.msra.mxu0 0.0
    %113 = vmatprep.subr.mxu0 0.0
    %114 = vmatpush1.msra.mxu0 0.0
    %115 = vmatprep.subr.mxu0 0.0
    %116 = vmatpush1.msra.mxu0 0.0
    %117 = vmatprep.subr.mxu0 0.0
    %118 = vmatpush1.msra.mxu0 0.0
    %119 = vmatprep.subr.mxu0 0.0
    %120 = vmatpush1.msra.mxu0 0.0
    %121 = vmatprep.subr.mxu0 0.0
    %122 = vmatpush1.msra.mxu0 0.0
    %123 = vmatprep.mubr.f32.mxu0 0.0
    %124 = vmatmul.mubr.f32.gmra.mrb[0].mxu0 %v57
    %v125 = vpop.f32.mrb[0].mxu0
    %v126 = vadd.f32 0.0, %v125
    %v127 = vpop.f32.mrb[0].mxu0
    %128 = vdwg.mxu0
    %v129 = vld [vmem:[#allocation7] sm:$0xff]
    %v130 = vld [vmem:[%s3] sm:$0xf]
    %v132 = vsel %vm55, %v126, 0
    %134 = vmatprep.subr.mxu0 0.0
    %135 = vmatpush1.msra.mxu0 %v129
    %136 = vmatprep.subr.mxu0 0.0
    %137 = vmatpush1.msra.mxu0 0.0
    %138 = vmatprep.subr.mxu0 0.0
    %139 = vmatpush1.msra.mxu0 0.0
    %140 = vmatprep.subr.mxu0 0.0
    %141 = vmatpush1.msra.mxu0 0.0
    %142 = vmatprep.subr.mxu0 0.0
    %143 = vmatpush1.msra.mxu0 0.0
    %144 = vmatprep.subr.mxu0 0.0
    %145 = vmatpush1.msra.mxu0 0.0
    %146 = vmatprep.subr.mxu0 0.0
    %147 = vmatpush1.msra.mxu0 0.0
    %148 = vmatprep.subr.mxu0 0.0
    %149 = vmatpush1.msra.mxu0 0.0
    %150 = vmatprep.subr.mxu0 0.0
    %151 = vmatpush1.msra.mxu0 0.0
    %152 = vmatprep.subr.mxu0 0.0
    %153 = vmatpush1.msra.mxu0 0.0
    %154 = vmatprep.subr.mxu0 0.0
    %155 = vmatpush1.msra.mxu0 0.0
    %156 = vmatprep.subr.mxu0 0.0
    %157 = vmatpush1.msra.mxu0 0.0
    %158 = vmatprep.subr.mxu0 0.0
    %159 = vmatpush1.msra.mxu0 0.0
    %160 = vmatprep.subr.mxu0 0.0
    %161 = vmatpush1.msra.mxu0 0.0
    %162 = vmatprep.subr.mxu0 0.0
    %163 = vmatpush1.msra.mxu0 0.0
    %164 = vmatprep.subr.mxu0 0.0
    %165 = vmatpush1.msra.mxu0 0.0
    %166 = vmatprep.subr.mxu0 0.0
    %167 = vmatpush1.msra.mxu0 0.0
    %168 = vmatprep.subr.mxu0 0.0
    %169 = vmatpush1.msra.mxu0 0.0
    %170 = vmatprep.subr.mxu0 0.0
    %171 = vmatpush1.msra.mxu0 0.0
    %172 = vmatprep.subr.mxu0 0.0
    %173 = vmatpush1.msra.mxu0 0.0
    %174 = vmatprep.subr.mxu0 0.0
    %175 = vmatpush1.msra.mxu0 0.0
    %176 = vmatprep.subr.mxu0 0.0
    %177 = vmatpush1.msra.mxu0 0.0
    %178 = vmatprep.subr.mxu0 0.0
    %179 = vmatpush1.msra.mxu0 0.0
    %180 = vmatprep.subr.mxu0 0.0
    %181 = vmatpush1.msra.mxu0 0.0
    %182 = vmatprep.subr.mxu0 0.0
    %183 = vmatpush1.msra.mxu0 0.0
    %184 = vmatprep.subr.mxu0 0.0
    %185 = vmatpush1.msra.mxu0 0.0
    %186 = vmatprep.subr.mxu0 0.0
    %187 = vmatpush1.msra.mxu0 0.0
    %188 = vmatprep.subr.mxu0 0.0
    %189 = vmatpush1.msra.mxu0 0.0
    %190 = vmatprep.subr.mxu0 0.0
    %191 = vmatpush1.msra.mxu0 0.0
    %192 = vmatprep.subr.mxu0 0.0
    %193 = vmatpush1.msra.mxu0 0.0
    %194 = vmatprep.subr.mxu0 0.0
    %195 = vmatpush1.msra.mxu0 0.0
    %196 = vmatprep.subr.mxu0 0.0
    %197 = vmatpush1.msra.mxu0 0.0
    %198 = vmatprep.mubr.f32.mxu0 0.0
    %199 = vmatmul.mubr.f32.gmra.mrb[0].mxu0 %v132
    %v200 = vpop.f32.mrb[0].mxu0
    %v201 = vadd.f32 %v130, %v200
    %v202 = vpop.f32.mrb[0].mxu0
    %203 = vdwg.mxu0
    %vm204 = vcmask 125952
    %205 = vst.msk [vmem:[#allocation8] sm:$0xf] %vm204, %v201
    // Predicated region
    $region30: #{tpu_custom_call.1} parent=1 // pred_check
      _
    $region31: #{tpu_custom_call.1} parent=1 // pred_check_branch
      %207 = sbr.rel (0) target = $region33
    $region32: #{tpu_custom_call.1} parent=1 // pred_region
      %s209 = ssub.s32 64, 64
      %210 = vsyncadd [#allocation4], %s209
      %s212 = sshll.u32 [#allocation8], 4
      %s213 = int_to_ptr.vmem [resolvable:$true] %s212
      %215 = dma.vmem_to_hbm [thread:$0]  %s213, 64, %s4, [#allocation4]
    $region33: #{tpu_custom_call.1} parent=1 // pred_fallthru
      _
    // Predicated region
    $region34: #{tpu_custom_call.1} parent=1 // pred_check
      _
    $region35: #{tpu_custom_call.1} parent=1 // pred_check_branch
      %217 = sbr.rel (0) target = $region37
    $region36: #{tpu_custom_call.1} parent=1 // pred_region
      %218 = dma.done [#allocation4], 64
    $region37: #{tpu_custom_call.1} parent=1 // pred_fallthru
      _
    %219 = vsyncpa [#allocation3], 1
    %220 = vsyncpa [#allocation6], 1
    %221 = vsyncpa [#allocation4], 1

</llo_original>
